<compile_context>
chip_gen: v7x
topology: tpu7x:2x2x1
jax: 0.10.0
libtpu: 0.0.40
codegen_flags: <defaults>
</compile_context>

<pallas_src>
import functools
import math

import jax
import jax.numpy as jnp
from jax.experimental import pallas as pl
from jax.experimental.pallas import tpu as pltpu

_LANE = 128
_SUBLANE = 8


def _round_up(x, m):
    return ((x + m - 1) // m) * m


def _has_bf16_eup():
    """bf16 VPU/EUP (fast bf16 tanh) exists on v6e and newer; keep f32 tanh otherwise."""
    try:
        kind = jax.devices()[0].device_kind.lower()
    except Exception:
        return False
    return not any(tag in kind for tag in ("v2", "v3", "v4", "v5"))


def _mlp_kernel(x_ref, w1_ref, b1_ref, w2_ref, b2_ref, w3_ref, b3_ref,
                w4_ref, b4_ref, o_ref, *, lane_out: bool, bf16_act: bool,
                n_chunks: int):
    tb = x_ref.shape[0]
    cb = tb // n_chunks

    # VMEM-resident params, loaded once per grid step (hoisted out of the chunk loop).
    w1, b1 = w1_ref[...], b1_ref[...]
    w2, b2 = w2_ref[...], b2_ref[...]
    w3, b3 = w3_ref[...], b3_ref[...]
    w4, b4 = w4_ref[...], b4_ref[...]

    def act(acc, b):
        z = acc + b                                   # f32 accum + f32 bias
        if bf16_act:                                  # v6e/v7x: bf16 EUP tanh, no extra cast
            return jnp.tanh(z.astype(jnp.bfloat16))
        return jnp.tanh(z).astype(jnp.bfloat16)       # v5e: f32 EUP tanh, cast for next MXU

    def fwd(xc):
        h = act(jnp.dot(xc, w1, preferred_element_type=jnp.float32), b1)
        h = act(jnp.dot(h, w2, preferred_element_type=jnp.float32), b2)
        h = act(jnp.dot(h, w3, preferred_element_type=jnp.float32), b3)
        if lane_out:
            # w4 is a (1, Hp) bf16 row; contract over Hp -> lane-dense (1, cb) result.
            return jax.lax.dot_general(
                w4, h, (((1,), (1,)), ((), ())),
                preferred_element_type=jnp.float32) + b4
        return jnp.dot(h, w4, preferred_element_type=jnp.float32) + b4

    # Static 2-way split: both chunks live in one basic block so the scheduler overlaps
    # chunk-A tanh (EUP) with chunk-B matmul (MXU).
    outs = [fwd(x_ref[pl.ds(c * cb, cb), :].astype(jnp.bfloat16))
            for c in range(n_chunks)]

    if lane_out:
        row = jnp.concatenate(outs, axis=1) if n_chunks > 1 else outs[0]   # (1, tb)
        o_ref[...] = row[None].astype(o_ref.dtype)                         # (1, 1, tb)
    else:
        col = jnp.concatenate(outs, axis=0) if n_chunks > 1 else outs[0]   # (tb, out_dim)
        o_ref[...] = col.astype(o_ref.dtype)


def init_params(key, in_dim, out_dim, hidden=250):
    """f32 params mimicking PyTorch nn.Linear default init
    (uniform in [-1/sqrt(fan_in), 1/sqrt(fan_in)]); weights stored (fan_in, fan_out)."""
    dims = [(in_dim, hidden), (hidden, hidden), (hidden, hidden), (hidden, out_dim)]
    params = {}
    for i, (fan_in, fan_out) in enumerate(dims, start=1):
        key, kw, kb = jax.random.split(key, 3)
        bound = 1.0 / math.sqrt(fan_in)
        params[f"w{i}"] = jax.random.uniform(
            kw, (fan_in, fan_out), jnp.float32, minval=-bound, maxval=bound)
        params[f"b{i}"] = jax.random.uniform(
            kb, (1, fan_out), jnp.float32, minval=-bound, maxval=bound)
    return params


def prepare_kernel_params(params):
    """Pad hidden dim to a multiple of 128, cast matmul weights to bf16 (biases f32),
    and pre-transpose w4 to a (1, Hp) bf16 row when out_dim == 1 (lane-dense output)."""
    w1, w2, w3, w4 = params["w1"], params["w2"], params["w3"], params["w4"]
    b1, b2, b3, b4 = params["b1"], params["b2"], params["b3"], params["b4"]
    hidden = w1.shape[1]
    out_dim = w4.shape[1]
    hp = _round_up(hidden, _LANE)
    ph = hp - hidden

    kp = {
        "w1": jnp.pad(w1, ((0, 0), (0, ph))).astype(jnp.bfloat16),
        "b1": jnp.pad(b1, ((0, 0), (0, ph))).astype(jnp.float32),
        "w2": jnp.pad(w2, ((0, ph), (0, ph))).astype(jnp.bfloat16),
        "b2": jnp.pad(b2, ((0, 0), (0, ph))).astype(jnp.float32),
        "w3": jnp.pad(w3, ((0, ph), (0, ph))).astype(jnp.bfloat16),
        "b3": jnp.pad(b3, ((0, 0), (0, ph))).astype(jnp.float32),
        "b4": b4.astype(jnp.float32),
        "out_dim": out_dim,
    }
    if out_dim == 1:
        kp["w4"] = jnp.pad(w4, ((0, ph), (0, 0))).T.astype(jnp.bfloat16)   # (1, Hp) row
    else:
        kp["w4"] = jnp.pad(w4, ((0, ph), (0, 0))).astype(jnp.bfloat16)     # (Hp, out_dim)
    return kp


def feedforward_critic(obs, kparams, *, tile_b=2048, bf16_act=None):
    """obs: (B, in_dim) float32 (bf16 accepted as-is). kparams: prepare_kernel_params()."""
    if obs.dtype not in (jnp.float32, jnp.bfloat16):
        obs = obs.astype(jnp.float32)
    B, in_dim = obs.shape
    out_dim = kparams["out_dim"]
    hp = kparams["w1"].shape[1]
    lane_out = (out_dim == 1)
    if bf16_act is None:
        bf16_act = _has_bf16_eup()

    # Batch tiling: large tiles to amortize per-step overhead; keep >= 2 (even) grid
    # steps whenever the batch allows it so v7x's two TensorCores split the work.
    n_steps = max(1, pl.cdiv(B, tile_b))
    if B >= 4 * _SUBLANE:                 # enough rows for two >=16-row tiles
        if n_steps < 2:
            n_steps = 2
        elif n_steps % 2:
            n_steps += 1
    tb = _round_up(pl.cdiv(B, n_steps), 2 * _SUBLANE)   # mult of 16 -> 2 aligned sub-chunks
    bp = tb * n_steps
    if bp != B:
        obs = jnp.pad(obs, ((0, bp - B), (0, 0)))
    n_chunks = 2 if tb >= 2 * _SUBLANE else 1

    def resident(arr):
        nd = arr.ndim
        # Full-array block, constant index: stays in VMEM across all grid steps.
        return pl.BlockSpec(arr.shape, lambda i, _nd=nd: (0,) * _nd)

    in_specs = [
        pl.BlockSpec((tb, in_dim), lambda i: (i, 0)),     # obs tile (pipelined over grid)
        resident(kparams["w1"]), resident(kparams["b1"]),
        resident(kparams["w2"]), resident(kparams["b2"]),
        resident(kparams["w3"]), resident(kparams["b3"]),
        resident(kparams["w4"]), resident(kparams["b4"]),
    ]
    if lane_out:
        # Lane-dense output: one (1, tb) f32 row per tile (no 1-valid-lane masked stores).
        out_shape = jax.ShapeDtypeStruct((n_steps, 1, tb), jnp.float32)
        out_specs = pl.BlockSpec((1, 1, tb), lambda i: (i, 0, 0))
    else:
        out_shape = jax.ShapeDtypeStruct((bp, out_dim), jnp.float32)
        out_specs = pl.BlockSpec((tb, out_dim), lambda i: (i, 0))

    # Scoped-VMEM budget: obs/out double-buffers + resident params + activation headroom.
    param_bytes = sum(int(kparams[k].size) * kparams[k].dtype.itemsize
                      for k in ("w1", "b1", "w2", "b2", "w3", "b3", "w4", "b4"))
    est = (2 * tb * in_dim * 4            # double-buffered obs tile
           + 2 * tb * _LANE * 4           # double-buffered output tile (padded estimate)
           + 8 * tb * hp * 4              # in-kernel activation live ranges (2 chunks)
           + 2 * param_bytes
           + (2 << 20))                   # slack
    vmem_limit = int(min(max(est, 16 << 20), 48 << 20))   # stay under v7x's 64 MiB/TC

    kernel = functools.partial(_mlp_kernel, lane_out=lane_out,
                               bf16_act=bf16_act, n_chunks=n_chunks)
    out = pl.pallas_call(
        kernel,
        out_shape=out_shape,
        grid=(n_steps,),
        in_specs=in_specs,
        out_specs=out_specs,
        compiler_params=pltpu.CompilerParams(
            dimension_semantics=("parallel",),            # v7x: 2 TCs split the batch grid
            vmem_limit_bytes=vmem_limit),
    )(obs,
      kparams["w1"], kparams["b1"],
      kparams["w2"], kparams["b2"],
      kparams["w3"], kparams["b3"],
      kparams["w4"], kparams["b4"])

    if lane_out:
        return out.reshape(bp, 1)[:B]
    return out[:B]


def reference_forward(obs, params):
    h = jnp.tanh(obs @ params["w1"] + params["b1"])
    h = jnp.tanh(h @ params["w2"] + params["b2"])
    h = jnp.tanh(h @ params["w3"] + params["b3"])
    return h @ params["w4"] + params["b4"]


if __name__ == "__main__":
    key = jax.random.PRNGKey(0)
    k_obs, k_obs_big, k_params = jax.random.split(key, 3)

    in_dim, out_dim = 32, 1      # critic: small obs dim, scalar value output
    params = init_params(k_params, in_dim, out_dim, hidden=250)
    kparams = prepare_kernel_params(params)

    # Small batch (remainder / padding, single-step grid path).
    obs_small = jax.random.normal(k_obs, (2, in_dim), dtype=jnp.float32)
    out_small = jax.block_until_ready(feedforward_critic(obs_small, kparams))
    ref_small = reference_forward(obs_small, params)
    assert out_small.shape == (2, out_dim)
    assert jnp.allclose(out_small, ref_small, atol=2.5e-2, rtol=2.5e-2), (
        float(jnp.max(jnp.abs(out_small - ref_small))))

    # Larger batch exercising the 2-step parallel grid (n_steps=2, tb=128).
    obs_big = jax.random.normal(k_obs_big, (256, in_dim), dtype=jnp.float32)
    out_big = jax.block_until_ready(feedforward_critic(obs_big, kparams))
    ref_big = reference_forward(obs_big, params)
    assert out_big.shape == (256, out_dim)
    assert jnp.allclose(out_big, ref_big, atol=2.5e-2, rtol=2.5e-2), (
        float(jnp.max(jnp.abs(out_big - ref_big))))

    print("KERNEL_OK")
</pallas_src>

<mosaic_0001>
module attributes {stable_mosaic.version = 11 : i64} {
  func.func @_mlp_kernel(%arg0: i32, %arg1: memref<16x32xf32, #tpu.memory_space<vmem>>, %arg2: memref<32x256xbf16, #tpu.memory_space<vmem>>, %arg3: memref<1x256xf32, #tpu.memory_space<vmem>>, %arg4: memref<256x256xbf16, #tpu.memory_space<vmem>>, %arg5: memref<1x256xf32, #tpu.memory_space<vmem>>, %arg6: memref<256x256xbf16, #tpu.memory_space<vmem>>, %arg7: memref<1x256xf32, #tpu.memory_space<vmem>>, %arg8: memref<1x256xbf16, #tpu.memory_space<vmem>>, %arg9: memref<1x1xf32, #tpu.memory_space<vmem>>, %arg10: memref<1x1x16xf32, #tpu.memory_space<vmem>>) attributes {dimension_semantics = [#tpu.dimension_semantics<parallel>], iteration_bounds = array<i64: 1>, scalar_prefetch = 0 : i64, scratch_operands = 0 : i64, tpu.core_type = #tpu.core_type<tc>, window_params = [{transform_indices = @transform_0, window_bounds = array<i64: 16, 32>}, {pipeline_mode = #tpu.pipeline_mode<synchronous>, transform_indices = @transform_1, window_bounds = array<i64: 32, 256>}, {pipeline_mode = #tpu.pipeline_mode<synchronous>, transform_indices = @transform_2, window_bounds = array<i64: 1, 256>}, {pipeline_mode = #tpu.pipeline_mode<synchronous>, transform_indices = @transform_3, window_bounds = array<i64: 256, 256>}, {pipeline_mode = #tpu.pipeline_mode<synchronous>, transform_indices = @transform_4, window_bounds = array<i64: 1, 256>}, {pipeline_mode = #tpu.pipeline_mode<synchronous>, transform_indices = @transform_5, window_bounds = array<i64: 256, 256>}, {pipeline_mode = #tpu.pipeline_mode<synchronous>, transform_indices = @transform_6, window_bounds = array<i64: 1, 256>}, {pipeline_mode = #tpu.pipeline_mode<synchronous>, transform_indices = @transform_7, window_bounds = array<i64: 1, 256>}, {pipeline_mode = #tpu.pipeline_mode<synchronous>, transform_indices = @transform_8, window_bounds = array<i64: 1, 1>}, {transform_indices = @transform_9, window_bounds = array<i64: 1, 1, 16>}]} {
    %c0 = arith.constant 0 : index
    %c0_0 = arith.constant 0 : index
    %0 = vector.load %arg2[%c0, %c0_0] : memref<32x256xbf16, #tpu.memory_space<vmem>>, vector<32x256xbf16>
    %c0_1 = arith.constant 0 : index
    %c0_2 = arith.constant 0 : index
    %1 = vector.load %arg3[%c0_1, %c0_2] : memref<1x256xf32, #tpu.memory_space<vmem>>, vector<1x256xf32>
    %c0_3 = arith.constant 0 : index
    %c0_4 = arith.constant 0 : index
    %2 = vector.load %arg4[%c0_3, %c0_4] : memref<256x256xbf16, #tpu.memory_space<vmem>>, vector<256x256xbf16>
    %c0_5 = arith.constant 0 : index
    %c0_6 = arith.constant 0 : index
    %3 = vector.load %arg5[%c0_5, %c0_6] : memref<1x256xf32, #tpu.memory_space<vmem>>, vector<1x256xf32>
    %c0_7 = arith.constant 0 : index
    %c0_8 = arith.constant 0 : index
    %4 = vector.load %arg6[%c0_7, %c0_8] : memref<256x256xbf16, #tpu.memory_space<vmem>>, vector<256x256xbf16>
    %c0_9 = arith.constant 0 : index
    %c0_10 = arith.constant 0 : index
    %5 = vector.load %arg7[%c0_9, %c0_10] : memref<1x256xf32, #tpu.memory_space<vmem>>, vector<1x256xf32>
    %c0_11 = arith.constant 0 : index
    %c0_12 = arith.constant 0 : index
    %6 = vector.load %arg8[%c0_11, %c0_12] : memref<1x256xbf16, #tpu.memory_space<vmem>>, vector<1x256xbf16>
    %c0_13 = arith.constant 0 : index
    %c0_14 = arith.constant 0 : index
    %7 = vector.load %arg9[%c0_13, %c0_14] : memref<1x1xf32, #tpu.memory_space<vmem>>, vector<1x1xf32>
    %c0_15 = arith.constant 0 : index
    %c0_16 = arith.constant 0 : index
    %8 = vector.load %arg1[%c0_15, %c0_16] : memref<16x32xf32, #tpu.memory_space<vmem>>, vector<8x32xf32>
    %9 = arith.truncf %8 : vector<8x32xf32> to vector<8x32xbf16>
    %cst = arith.constant dense<0.000000e+00> : vector<8x256xf32>
    %10 = tpu.matmul %9, %0, %cst {dimension_numbers = #tpu.dot_dimension_numbers<[1], [0], [0], [1], [0, 0, 1, 1], [], []>} : vector<8x32xbf16>, vector<32x256xbf16>, vector<8x256xf32> -> vector<8x256xf32>
    %11 = vector.broadcast %1 : vector<1x256xf32> to vector<8x256xf32>
    %12 = arith.addf %10, %11 : vector<8x256xf32>
    %13 = arith.truncf %12 : vector<8x256xf32> to vector<8x256xbf16>
    %14 = math.tanh %13 : vector<8x256xbf16>
    %cst_17 = arith.constant dense<0.000000e+00> : vector<8x256xf32>
    %15 = tpu.matmul %14, %2, %cst_17 {dimension_numbers = #tpu.dot_dimension_numbers<[1], [0], [0], [1], [0, 0, 1, 1], [], []>} : vector<8x256xbf16>, vector<256x256xbf16>, vector<8x256xf32> -> vector<8x256xf32>
    %16 = vector.broadcast %3 : vector<1x256xf32> to vector<8x256xf32>
    %17 = arith.addf %15, %16 : vector<8x256xf32>
    %18 = arith.truncf %17 : vector<8x256xf32> to vector<8x256xbf16>
    %19 = math.tanh %18 : vector<8x256xbf16>
    %cst_18 = arith.constant dense<0.000000e+00> : vector<8x256xf32>
    %20 = tpu.matmul %19, %4, %cst_18 {dimension_numbers = #tpu.dot_dimension_numbers<[1], [0], [0], [1], [0, 0, 1, 1], [], []>} : vector<8x256xbf16>, vector<256x256xbf16>, vector<8x256xf32> -> vector<8x256xf32>
    %21 = vector.broadcast %5 : vector<1x256xf32> to vector<8x256xf32>
    %22 = arith.addf %20, %21 : vector<8x256xf32>
    %23 = arith.truncf %22 : vector<8x256xf32> to vector<8x256xbf16>
    %24 = math.tanh %23 : vector<8x256xbf16>
    %cst_19 = arith.constant dense<0.000000e+00> : vector<1x8xf32>
    %25 = tpu.matmul %6, %24, %cst_19 {dimension_numbers = #tpu.dot_dimension_numbers<[1], [1], [0], [0], [0, 0, 1, 0], [], []>} : vector<1x256xbf16>, vector<8x256xbf16>, vector<1x8xf32> -> vector<1x8xf32>
    %26 = vector.broadcast %7 : vector<1x1xf32> to vector<1x8xf32>
    %27 = arith.addf %25, %26 : vector<1x8xf32>
    %c8 = arith.constant 8 : index
    %c0_20 = arith.constant 0 : index
    %28 = vector.load %arg1[%c8, %c0_20] : memref<16x32xf32, #tpu.memory_space<vmem>>, vector<8x32xf32>
    %29 = arith.truncf %28 : vector<8x32xf32> to vector<8x32xbf16>
    %cst_21 = arith.constant dense<0.000000e+00> : vector<8x256xf32>
    %30 = tpu.matmul %29, %0, %cst_21 {dimension_numbers = #tpu.dot_dimension_numbers<[1], [0], [0], [1], [0, 0, 1, 1], [], []>} : vector<8x32xbf16>, vector<32x256xbf16>, vector<8x256xf32> -> vector<8x256xf32>
    %31 = vector.broadcast %1 : vector<1x256xf32> to vector<8x256xf32>
    %32 = arith.addf %30, %31 : vector<8x256xf32>
    %33 = arith.truncf %32 : vector<8x256xf32> to vector<8x256xbf16>
    %34 = math.tanh %33 : vector<8x256xbf16>
    %cst_22 = arith.constant dense<0.000000e+00> : vector<8x256xf32>
    %35 = tpu.matmul %34, %2, %cst_22 {dimension_numbers = #tpu.dot_dimension_numbers<[1], [0], [0], [1], [0, 0, 1, 1], [], []>} : vector<8x256xbf16>, vector<256x256xbf16>, vector<8x256xf32> -> vector<8x256xf32>
    %36 = vector.broadcast %3 : vector<1x256xf32> to vector<8x256xf32>
    %37 = arith.addf %35, %36 : vector<8x256xf32>
    %38 = arith.truncf %37 : vector<8x256xf32> to vector<8x256xbf16>
    %39 = math.tanh %38 : vector<8x256xbf16>
    %cst_23 = arith.constant dense<0.000000e+00> : vector<8x256xf32>
    %40 = tpu.matmul %39, %4, %cst_23 {dimension_numbers = #tpu.dot_dimension_numbers<[1], [0], [0], [1], [0, 0, 1, 1], [], []>} : vector<8x256xbf16>, vector<256x256xbf16>, vector<8x256xf32> -> vector<8x256xf32>
    %41 = vector.broadcast %5 : vector<1x256xf32> to vector<8x256xf32>
    %42 = arith.addf %40, %41 : vector<8x256xf32>
    %43 = arith.truncf %42 : vector<8x256xf32> to vector<8x256xbf16>
    %44 = math.tanh %43 : vector<8x256xbf16>
    %cst_24 = arith.constant dense<0.000000e+00> : vector<1x8xf32>
    %45 = tpu.matmul %6, %44, %cst_24 {dimension_numbers = #tpu.dot_dimension_numbers<[1], [1], [0], [0], [0, 0, 1, 0], [], []>} : vector<1x256xbf16>, vector<8x256xbf16>, vector<1x8xf32> -> vector<1x8xf32>
    %46 = vector.broadcast %7 : vector<1x1xf32> to vector<1x8xf32>
    %47 = arith.addf %45, %46 : vector<1x8xf32>
    %48 = tpu.concatenate %27, %47 in 1 : vector<1x8xf32>, vector<1x8xf32> -> vector<1x16xf32>
    %49 = vector.shape_cast %48 : vector<1x16xf32> to vector<1x1x16xf32>
    %c0_25 = arith.constant 0 : index
    %c0_26 = arith.constant 0 : index
    %c0_27 = arith.constant 0 : index
    %50 = vector.load %arg10[%c0_25, %c0_26, %c0_27] : memref<1x1x16xf32, #tpu.memory_space<vmem>>, vector<1x1x16xf32>
    tpu.vector_store %arg10[%c0_25, %c0_26, %c0_27], %49 {strides = array<i32>} : memref<1x1x16xf32, #tpu.memory_space<vmem>>, vector<1x1x16xf32>,
    return
  }
  func.func @transform_0(%arg0: i32) -> (i32, i32) {
    %c0_i32 = arith.constant 0 : i32
    %c0_i32_0 = arith.constant 0 : i32
    return %arg0, %c0_i32 : i32, i32
  }
  func.func @transform_1(%arg0: i32) -> (i32, i32) {
    %c0_i32 = arith.constant 0 : i32
    %c0_i32_0 = arith.constant 0 : i32
    %c0_i32_1 = arith.constant 0 : i32
    return %c0_i32, %c0_i32_0 : i32, i32
  }
  func.func @transform_2(%arg0: i32) -> (i32, i32) {
    %c0_i32 = arith.constant 0 : i32
    %c0_i32_0 = arith.constant 0 : i32
    %c0_i32_1 = arith.constant 0 : i32
    return %c0_i32, %c0_i32_0 : i32, i32
  }
  func.func @transform_3(%arg0: i32) -> (i32, i32) {
    %c0_i32 = arith.constant 0 : i32
    %c0_i32_0 = arith.constant 0 : i32
    %c0_i32_1 = arith.constant 0 : i32
    return %c0_i32, %c0_i32_0 : i32, i32
  }
  func.func @transform_4(%arg0: i32) -> (i32, i32) {
    %c0_i32 = arith.constant 0 : i32
    %c0_i32_0 = arith.constant 0 : i32
    %c0_i32_1 = arith.constant 0 : i32
    return %c0_i32, %c0_i32_0 : i32, i32
  }
  func.func @transform_5(%arg0: i32) -> (i32, i32) {
    %c0_i32 = arith.constant 0 : i32
    %c0_i32_0 = arith.constant 0 : i32
    %c0_i32_1 = arith.constant 0 : i32
    return %c0_i32, %c0_i32_0 : i32, i32
  }
  func.func @transform_6(%arg0: i32) -> (i32, i32) {
    %c0_i32 = arith.constant 0 : i32
    %c0_i32_0 = arith.constant 0 : i32
    %c0_i32_1 = arith.constant 0 : i32
    return %c0_i32, %c0_i32_0 : i32, i32
  }
  func.func @transform_7(%arg0: i32) -> (i32, i32) {
    %c0_i32 = arith.constant 0 : i32
    %c0_i32_0 = arith.constant 0 : i32
    %c0_i32_1 = arith.constant 0 : i32
    return %c0_i32, %c0_i32_0 : i32, i32
  }
  func.func @transform_8(%arg0: i32) -> (i32, i32) {
    %c0_i32 = arith.constant 0 : i32
    %c0_i32_0 = arith.constant 0 : i32
    %c0_i32_1 = arith.constant 0 : i32
    return %c0_i32, %c0_i32_0 : i32, i32
  }
  func.func @transform_9(%arg0: i32) -> (i32, i32, i32) {
    %c0_i32 = arith.constant 0 : i32
    %c0_i32_0 = arith.constant 0 : i32
    %c0_i32_1 = arith.constant 0 : i32
    return %arg0, %c0_i32, %c0_i32_0 : i32, i32, i32
  }
}

</mosaic_0001>

<llo_original>
// kernel: tpu_custom_call.1
$region0: #{tpu_custom_call.1}
  #allocation0 [shape = 'u32[]', space=smem, size = 0x4, offset = 0x4, fixed_abs, tag = 'smem constant byte address 0x4 - core index']
  #allocation1 [shape = 'u32[144,128]{1,0:T(1,128)}', space=vmem, size = 0x12000, scoped, tag = 'internal scratch']
  #allocation2 [shape = 'f32[1,1]{1,0:T(1,128)S(1)}', space=vmem, size = 0x200, scoped, tag = 'scoped memory for tpu_custom_call.1']
  %s0 = inlined_call_operand.hbm [shape: f32[16,32], index: 0, kind: input, shape index: {}]
  %s1 = inlined_call_operand.hbm [shape: bf16[32,256], index: 1, kind: input, shape index: {}]
  %s2 = inlined_call_operand.vmem [shape: f32[1,256], index: 2, kind: input, shape index: {}]
  %s3 = inlined_call_operand.hbm [shape: bf16[256,256], index: 3, kind: input, shape index: {}]
  %s4 = inlined_call_operand.vmem [shape: f32[1,256], index: 4, kind: input, shape index: {}]
  %s5 = inlined_call_operand.hbm [shape: bf16[256,256], index: 5, kind: input, shape index: {}]
  %s6 = inlined_call_operand.vmem [shape: f32[1,256], index: 6, kind: input, shape index: {}]
  %s7 = inlined_call_operand.vmem [shape: bf16[1,256], index: 7, kind: input, shape index: {}]
  %s8 = inlined_call_operand.<no memory space> [shape: f32[1,1], index: 8, kind: input, shape index: {}]
  %s9 = inlined_call_operand.hbm [shape: f32[1,1,16], index: 9, kind: output, shape index: {}]
  %s10 = sld [smem:[#allocation0]]
  $region62: #{tpu_custom_call.1} parent=0
    _
  %s12 = ssub.s32 1, %s10
  %s13 = scalar_select 0, %s12, %s10
  %v14 = vstv %s8
  %15 = vst [vmem:[#allocation2] sm:$0x1] %v14
  $region1: #{tpu_custom_call.1} parent=0
    #allocation3 [shape = 'u8[8192]{0}', space=vmem, size = 0x2000, scoped, tag = 'input window, operand 0, single buffered']
    #allocation4 [shape = 's32[1]{0}', space=sflag, size = 0x4, scoped, tag = 'scoped memory for tpu_custom_call.1']
    #allocation5 [shape = 's32[1]{0}', space=sflag, size = 0x4, scoped, tag = 'scoped memory for tpu_custom_call.1']
    #allocation6 [shape = 'u8[16384]{0}', space=vmem, size = 0x4000, scoped, tag = 'input window, operand 1, single buffered']
    #allocation7 [shape = 's32[1]{0}', space=sflag, size = 0x4, scoped, tag = 'scoped memory for tpu_custom_call.1']
    #allocation8 [shape = 'u8[131072]{0}', space=vmem, size = 0x20000, scoped, tag = 'input window, operand 3, single buffered']
    #allocation9 [shape = 'u8[131072]{0}', space=vmem, size = 0x20000, scoped, tag = 'input window, operand 5, single buffered']
    #allocation10 [shape = 's32[1]{0}', space=sflag, size = 0x4, scoped, tag = 'scoped memory for tpu_custom_call.1']
    #allocation11 [shape = 'u8[512]{0}', space=vmem, size = 0x400, scoped, tag = 'output window, operand 0, single buffered']
    %16 = vsyncpa [#allocation4], 0
    %17 = vsyncpa [#allocation7], 0
    %18 = vsyncpa [#allocation10], 0
    %19 = vsyncpa [#allocation5], 0
    // Predicated region
    $region2: #{tpu_custom_call.1} parent=1 // pred_check
      _
    $region3: #{tpu_custom_call.1} parent=1 // pred_check_branch
      %21 = sbr.rel (0) target = $region5
    $region4: #{tpu_custom_call.1} parent=1 // pred_region
      %s23 = ssub.s32 256, 256
      %24 = vsyncadd [#allocation4], %s23
      %s25 = sshll.u32 [#allocation3], 4
      %s26 = int_to_ptr.vmem [resolvable:$true] %s25
      %31 = dma.hbm_to_vmem [thread:$0]  %s0, 256, %s26, [#allocation4], 128, 128, 8
    $region5: #{tpu_custom_call.1} parent=1 // pred_fallthru
      _
    // Predicated region
    $region6: #{tpu_custom_call.1} parent=1 // pred_check
      _
    $region7: #{tpu_custom_call.1} parent=1 // pred_check_branch
      %33 = sbr.rel (0) target = $region9
    $region8: #{tpu_custom_call.1} parent=1 // pred_region
      %s35 = ssub.s32 512, 512
      %36 = vsyncadd [#allocation7], %s35
      %s37 = sshll.u32 [#allocation6], 4
      %s38 = int_to_ptr.vmem [resolvable:$true] %s37
      %43 = dma.hbm_to_vmem [thread:$0]  %s1, 512, %s38, [#allocation7], 128, 128, 8
    $region9: #{tpu_custom_call.1} parent=1 // pred_fallthru
      _
    // Predicated region
    $region10: #{tpu_custom_call.1} parent=1 // pred_check
      _
    $region11: #{tpu_custom_call.1} parent=1 // pred_check_branch
      %45 = sbr.rel (0) target = $region13
    $region12: #{tpu_custom_call.1} parent=1 // pred_region
      _
    $region13: #{tpu_custom_call.1} parent=1 // pred_fallthru
      _
    // Predicated region
    $region14: #{tpu_custom_call.1} parent=1 // pred_check
      _
    $region15: #{tpu_custom_call.1} parent=1 // pred_check_branch
      %47 = sbr.rel (0) target = $region17
    $region16: #{tpu_custom_call.1} parent=1 // pred_region
      %s49 = ssub.s32 4096, 4096
      %50 = vsyncadd [#allocation7], %s49
      %s51 = sshll.u32 [#allocation8], 4
      %s52 = int_to_ptr.vmem [resolvable:$true] %s51
      %57 = dma.hbm_to_vmem [thread:$0]  %s3, 4096, %s52, [#allocation7], 128, 128, 8
    $region17: #{tpu_custom_call.1} parent=1 // pred_fallthru
      _
    // Predicated region
    $region18: #{tpu_custom_call.1} parent=1 // pred_check
      _
    $region19: #{tpu_custom_call.1} parent=1 // pred_check_branch
      %59 = sbr.rel (0) target = $region21
    $region20: #{tpu_custom_call.1} parent=1 // pred_region
      _
    $region21: #{tpu_custom_call.1} parent=1 // pred_fallthru
      _
    // Predicated region
    $region22: #{tpu_custom_call.1} parent=1 // pred_check
      _
    $region23: #{tpu_custom_call.1} parent=1 // pred_check_branch
      %61 = sbr.rel (0) target = $region25
    $region24: #{tpu_custom_call.1} parent=1 // pred_region
      %s63 = ssub.s32 4096, 4096
      %64 = vsyncadd [#allocation10], %s63
      %s65 = sshll.u32 [#allocation9], 4
      %s66 = int_to_ptr.vmem [resolvable:$true] %s65
      %71 = dma.hbm_to_vmem [thread:$0]  %s5, 4096, %s66, [#allocation10], 128, 128, 8
    $region25: #{tpu_custom_call.1} parent=1 // pred_fallthru
      _
    // Predicated region
    $region26: #{tpu_custom_call.1} parent=1 // pred_check
      _
    $region27: #{tpu_custom_call.1} parent=1 // pred_check_branch
      %73 = sbr.rel (0) target = $region29
    $region28: #{tpu_custom_call.1} parent=1 // pred_region
      _
    $region29: #{tpu_custom_call.1} parent=1 // pred_fallthru
      _
    // Predicated region
    $region30: #{tpu_custom_call.1} parent=1 // pred_check
      _
    $region31: #{tpu_custom_call.1} parent=1 // pred_check_branch
      %75 = sbr.rel (0) target = $region33
    $region32: #{tpu_custom_call.1} parent=1 // pred_region
      _
    $region33: #{tpu_custom_call.1} parent=1 // pred_fallthru
      _
    // Predicated region
    $region34: #{tpu_custom_call.1} parent=1 // pred_check
      _
    $region35: #{tpu_custom_call.1} parent=1 // pred_check_branch
      %77 = sbr.rel (0) target = $region37
    $region36: #{tpu_custom_call.1} parent=1 // pred_region
      _
    $region37: #{tpu_custom_call.1} parent=1 // pred_fallthru
      _
    // Predicated region
    $region38: #{tpu_custom_call.1} parent=1 // pred_check
      _
    $region39: #{tpu_custom_call.1} parent=1 // pred_check_branch
      %79 = sbr.rel (0) target = $region41
    $region40: #{tpu_custom_call.1} parent=1 // pred_region
      %80 = dma.done [#allocation4], 256
    $region41: #{tpu_custom_call.1} parent=1 // pred_fallthru
      _
    // Predicated region
    $region42: #{tpu_custom_call.1} parent=1 // pred_check
      _
    $region43: #{tpu_custom_call.1} parent=1 // pred_check_branch
      %82 = sbr.rel (0) target = $region45
    $region44: #{tpu_custom_call.1} parent=1 // pred_region
      %83 = dma.done [#allocation7], 512
    $region45: #{tpu_custom_call.1} parent=1 // pred_fallthru
      _
    // Predicated region
    $region46: #{tpu_custom_call.1} parent=1 // pred_check
      _
    $region47: #{tpu_custom_call.1} parent=1 // pred_check_branch
      %85 = sbr.rel (0) target = $region49
    $region48: #{tpu_custom_call.1} parent=1 // pred_region
      %86 = dma.done [#allocation7], 4096
    $region49: #{tpu_custom_call.1} parent=1 // pred_fallthru
      _
    // Predicated region
    $region50: #{tpu_custom_call.1} parent=1 // pred_check
      _
    $region51: #{tpu_custom_call.1} parent=1 // pred_check_branch
      %88 = sbr.rel (0) target = $region53
    $region52: #{tpu_custom_call.1} parent=1 // pred_region
      %89 = dma.done [#allocation10], 4096
    $region53: #{tpu_custom_call.1} parent=1 // pred_fallthru
      _
    %v91 = vld [vmem:[#allocation6] sm:$0xff]
    %v92 = vld [vmem:[#allocation6 + $0x8] sm:$0xff]
    %v93 = vld [vmem:[#allocation6 + $0x10] sm:$0xff]
    %v94 = vld [vmem:[#allocation6 + $0x18] sm:$0xff]
    %v95 = vld [vmem:[%s2] sm:$0x3]
    %v96 = vld [vmem:[#allocation8] sm:$0xff]
    %v97 = vld [vmem:[#allocation8 + $0x8] sm:$0xff]
    %v98 = vld [vmem:[#allocation8 + $0x10] sm:$0xff]
    %v99 = vld [vmem:[#allocation8 + $0x18] sm:$0xff]
    %v100 = vld [vmem:[#allocation8 + $0x20] sm:$0xff]
    %v101 = vld [vmem:[#allocation8 + $0x28] sm:$0xff]
    %v102 = vld [vmem:[#allocation8 + $0x30] sm:$0xff]
    %v103 = vld [vmem:[#allocation8 + $0x38] sm:$0xff]
    %v104 = vld [vmem:[#allocation8 + $0x40] sm:$0xff]
    %v105 = vld [vmem:[#allocation8 + $0x48] sm:$0xff]
    %v106 = vld [vmem:[#allocation8 + $0x50] sm:$0xff]
    %v107 = vld [vmem:[#allocation8 + $0x58] sm:$0xff]
    %v108 = vld [vmem:[#allocation8 + $0x60] sm:$0xff]
    %v109 = vld [vmem:[#allocation8 + $0x68] sm:$0xff]
    %v110 = vld [vmem:[#allocation8 + $0x70] sm:$0xff]
    %v111 = vld [vmem:[#allocation8 + $0x78] sm:$0xff]
    %v112 = vld [vmem:[#allocation8 + $0x80] sm:$0xff]
    %v113 = vld [vmem:[#allocation8 + $0x88] sm:$0xff]
    %v114 = vld [vmem:[#allocation8 + $0x90] sm:$0xff]
    %v115 = vld [vmem:[#allocation8 + $0x98] sm:$0xff]
    %v116 = vld [vmem:[#allocation8 + $0xa0] sm:$0xff]
    %v117 = vld [vmem:[#allocation8 + $0xa8] sm:$0xff]
    %v118 = vld [vmem:[#allocation8 + $0xb0] sm:$0xff]
    %v119 = vld [vmem:[#allocation8 + $0xb8] sm:$0xff]
    %v120 = vld [vmem:[#allocation8 + $0xc0] sm:$0xff]
    %v121 = vld [vmem:[#allocation8 + $0xc8] sm:$0xff]
    %v122 = vld [vmem:[#allocation8 + $0xd0] sm:$0xff]
    %v123 = vld [vmem:[#allocation8 + $0xd8] sm:$0xff]
    %v124 = vld [vmem:[#allocation8 + $0xe0] sm:$0xff]
    %v125 = vld [vmem:[#allocation8 + $0xe8] sm:$0xff]
    %v126 = vld [vmem:[#allocation8 + $0xf0] sm:$0xff]
    %v127 = vld [vmem:[#allocation8 + $0xf8] sm:$0xff]
    %v128 = vld [vmem:[%s4] sm:$0x3]
    %v129 = vld [vmem:[#allocation9] sm:$0xff]
    %v130 = vld [vmem:[#allocation9 + $0x8] sm:$0xff]
    %v131 = vld [vmem:[#allocation9 + $0x10] sm:$0xff]
    %v132 = vld [vmem:[#allocation9 + $0x18] sm:$0xff]
    %v133 = vld [vmem:[#allocation9 + $0x20] sm:$0xff]
    %v134 = vld [vmem:[#allocation9 + $0x28] sm:$0xff]
    %v135 = vld [vmem:[#allocation9 + $0x30] sm:$0xff]
    %v136 = vld [vmem:[#allocation9 + $0x38] sm:$0xff]
    %v137 = vld [vmem:[#allocation9 + $0x40] sm:$0xff]
    %v138 = vld [vmem:[#allocation9 + $0x48] sm:$0xff]
    %v139 = vld [vmem:[#allocation9 + $0x50] sm:$0xff]
    %v140 = vld [vmem:[#allocation9 + $0x58] sm:$0xff]
    %v141 = vld [vmem:[#allocation9 + $0x60] sm:$0xff]
    %v142 = vld [vmem:[#allocation9 + $0x68] sm:$0xff]
    %v143 = vld [vmem:[#allocation9 + $0x70] sm:$0xff]
    %v144 = vld [vmem:[#allocation9 + $0x78] sm:$0xff]
    %v145 = vld [vmem:[#allocation9 + $0x80] sm:$0xff]
    %v146 = vld [vmem:[#allocation9 + $0x88] sm:$0xff]
    %v147 = vld [vmem:[#allocation9 + $0x90] sm:$0xff]
    %v148 = vld [vmem:[#allocation9 + $0x98] sm:$0xff]
    %v149 = vld [vmem:[#allocation9 + $0xa0] sm:$0xff]
    %v150 = vld [vmem:[#allocation9 + $0xa8] sm:$0xff]
    %v151 = vld [vmem:[#allocation9 + $0xb0] sm:$0xff]
    %v152 = vld [vmem:[#allocation9 + $0xb8] sm:$0xff]
    %v153 = vld [vmem:[#allocation9 + $0xc0] sm:$0xff]
    %v154 = vld [vmem:[#allocation9 + $0xc8] sm:$0xff]
    %v155 = vld [vmem:[#allocation9 + $0xd0] sm:$0xff]
    %v156 = vld [vmem:[#allocation9 + $0xd8] sm:$0xff]
    %v157 = vld [vmem:[#allocation9 + $0xe0] sm:$0xff]
    %v158 = vld [vmem:[#allocation9 + $0xe8] sm:$0xff]
    %v159 = vld [vmem:[#allocation9 + $0xf0] sm:$0xff]
    %v160 = vld [vmem:[#allocation9 + $0xf8] sm:$0xff]
    %v161 = vld [vmem:[%s6] sm:$0x3]
    %v162 = vld [vmem:[%s7] sm:$0x3]
    %v163 = vld [vmem:[#allocation2] sm:$0x1]
    %v164 = vld [vmem:[#allocation3] sm:$0xff]
    %v165 = vpack.c.bf16 %v164, %v164
    %v167 = vlaneseq
    %v168 = vshrl.u32 %v167, 7
    %v169 = vsub.s32 0, %v168
    %v170 = vrot.slane %v95, %v169
    %v171 = vlaneseq
    %v172 = vshrl.u32 %v171, 7
    %v173 = vsub.s32 1, %v172
    %v174 = vrot.slane %v95, %v173
    %v181 = vunpack.c.l.b16 %v91
    %v182 = vunpack.c.h.b16 %v91
    %v183 = vunpack.c.l.b16 %v92
    %v184 = vunpack.c.h.b16 %v92
    %v185 = vunpack.c.l.b16 %v93
    %v186 = vunpack.c.h.b16 %v93
    %v187 = vunpack.c.l.b16 %v94
    %v188 = vunpack.c.h.b16 %v94
    %v189 = vpack.c.b16 %v183, %v181
    %v190 = vpack.c.b16 %v184, %v182
    %v191 = vpack.c.b16 %v187, %v185
    %v192 = vpack.c.b16 %v188, %v186
    %vm197 = vcmask 261120
    %v199 = vsel %vm197, %v165, 0
    %201 = vmatprep.subr.bf16.mxu0 %v190
    %202 = vmatpush1.bf16.msra.mxu0 %v189
    %203 = vmatprep.subr.bf16.mxu0 %v192
    %204 = vmatpush1.bf16.msra.mxu0 %v191
    %205 = vmatprep.subr.bf16.mxu0 0
    %206 = vmatpush1.bf16.msra.mxu0 0
    %207 = vmatprep.subr.bf16.mxu0 0
    %208 = vmatpush1.bf16.msra.mxu0 0
    %209 = vmatprep.subr.bf16.mxu0 0
    %210 = vmatpush1.bf16.msra.mxu0 0
    %211 = vmatprep.subr.bf16.mxu0 0
    %212 = vmatpush1.bf16.msra.mxu0 0
    %213 = vmatprep.subr.bf16.mxu0 0
    %214 = vmatpush1.bf16.msra.mxu0 0
    %215 = vmatprep.subr.bf16.mxu0 0
    %216 = vmatpush1.bf16.msra.mxu0 0
    %217 = vmatprep.subr.bf16.mxu0 0
    %218 = vmatpush1.bf16.msra.mxu0 0
    %219 = vmatprep.subr.bf16.mxu0 0
    %220 = vmatpush1.bf16.msra.mxu0 0
    %221 = vmatprep.subr.bf16.mxu0 0
    %222 = vmatpush1.bf16.msra.mxu0 0
    %223 = vmatprep.subr.bf16.mxu0 0
    %224 = vmatpush1.bf16.msra.mxu0 0
    %225 = vmatprep.subr.bf16.mxu0 0
    %226 = vmatpush1.bf16.msra.mxu0 0
    %227 = vmatprep.subr.bf16.mxu0 0
    %228 = vmatpush1.bf16.msra.mxu0 0
    %229 = vmatprep.subr.bf16.mxu0 0
    %230 = vmatpush1.bf16.msra.mxu0 0
    %231 = vmatprep.subr.bf16.mxu0 0
    %232 = vmatpush1.bf16.msra.mxu0 0
    %233 = vmatprep.mubr.bf16.mxu0 0
    %234 = vmatmul.mubr.bf16.gmra.mrb[0].mxu0 %v199
    %v235 = vpop.f32.mrb[0].mxu0
    %v236 = vadd.f32 %v170, %v235
    %v237 = vpop.f32.mrb[0].mxu0
    %v238 = vadd.f32 %v174, %v237
    %v239 = vpop.f32.mrb[0].mxu0
    %v240 = vpop.f32.mrb[0].mxu0
    %241 = vdwg.mxu0
    %v242 = vpack.c.bf16 %v236, %v236
    %v243 = vpack.c.bf16 %v238, %v238
    %v244 = vtanh.bf16.pop %v242
    %v245 = vtanh.bf16.pop %v243
    %v247 = vlaneseq
    %v248 = vshrl.u32 %v247, 7
    %v249 = vsub.s32 0, %v248
    %v250 = vrot.slane %v128, %v249
    %v251 = vlaneseq
    %v252 = vshrl.u32 %v251, 7
    %v253 = vsub.s32 1, %v252
    %v254 = vrot.slane %v128, %v253
    %v289 = vunpack.c.l.b16 %v96
    %v290 = vunpack.c.h.b16 %v96
    %v291 = vunpack.c.l.b16 %v97
    %v292 = vunpack.c.h.b16 %v97
    %v293 = vunpack.c.l.b16 %v98
    %v294 = vunpack.c.h.b16 %v98
    %v295 = vunpack.c.l.b16 %v99
    %v296 = vunpack.c.h.b16 %v99
    %v297 = vunpack.c.l.b16 %v100
    %v298 = vunpack.c.h.b16 %v100
    %v299 = vunpack.c.l.b16 %v101
    %v300 = vunpack.c.h.b16 %v101
    %v301 = vunpack.c.l.b16 %v102
    %v302 = vunpack.c.h.b16 %v102
    %v303 = vunpack.c.l.b16 %v103
    %v304 = vunpack.c.h.b16 %v103
    %v305 = vunpack.c.l.b16 %v104
    %v306 = vunpack.c.h.b16 %v104
    %v307 = vunpack.c.l.b16 %v105
    %v308 = vunpack.c.h.b16 %v105
    %v309 = vunpack.c.l.b16 %v106
    %v310 = vunpack.c.h.b16 %v106
    %v311 = vunpack.c.l.b16 %v107
    %v312 = vunpack.c.h.b16 %v107
    %v313 = vunpack.c.l.b16 %v108
    %v314 = vunpack.c.h.b16 %v108
    %v315 = vunpack.c.l.b16 %v109
    %v316 = vunpack.c.h.b16 %v109
    %v317 = vunpack.c.l.b16 %v110
    %v318 = vunpack.c.h.b16 %v110
    %v319 = vunpack.c.l.b16 %v111
    %v320 = vunpack.c.h.b16 %v111
    %v321 = vunpack.c.l.b16 %v112
    %v322 = vunpack.c.h.b16 %v112
    %v323 = vunpack.c.l.b16 %v113
    %v324 = vunpack.c.h.b16 %v113
    %v325 = vunpack.c.l.b16 %v114
    %v326 = vunpack.c.h.b16 %v114
    %v327 = vunpack.c.l.b16 %v115
    %v328 = vunpack.c.h.b16 %v115
    %v329 = vunpack.c.l.b16 %v116
    %v330 = vunpack.c.h.b16 %v116
    %v331 = vunpack.c.l.b16 %v117
    %v332 = vunpack.c.h.b16 %v117
    %v333 = vunpack.c.l.b16 %v118
    %v334 = vunpack.c.h.b16 %v118
    %v335 = vunpack.c.l.b16 %v119
    %v336 = vunpack.c.h.b16 %v119
    %v337 = vunpack.c.l.b16 %v120
    %v338 = vunpack.c.h.b16 %v120
    %v339 = vunpack.c.l.b16 %v121
    %v340 = vunpack.c.h.b16 %v121
    %v341 = vunpack.c.l.b16 %v122
    %v342 = vunpack.c.h.b16 %v122
    %v343 = vunpack.c.l.b16 %v123
    %v344 = vunpack.c.h.b16 %v123
    %v345 = vunpack.c.l.b16 %v124
    %v346 = vunpack.c.h.b16 %v124
    %v347 = vunpack.c.l.b16 %v125
    %v348 = vunpack.c.h.b16 %v125
    %v349 = vunpack.c.l.b16 %v126
    %v350 = vunpack.c.h.b16 %v126
    %v351 = vunpack.c.l.b16 %v127
    %v352 = vunpack.c.h.b16 %v127
    %v353 = vpack.c.b16 %v291, %v289
    %v354 = vpack.c.b16 %v292, %v290
    %v355 = vpack.c.b16 %v295, %v293
    %v356 = vpack.c.b16 %v296, %v294
    %v357 = vpack.c.b16 %v299, %v297
    %v358 = vpack.c.b16 %v300, %v298
    %v359 = vpack.c.b16 %v303, %v301
    %v360 = vpack.c.b16 %v304, %v302
    %v361 = vpack.c.b16 %v307, %v305
    %v362 = vpack.c.b16 %v308, %v306
    %v363 = vpack.c.b16 %v311, %v309
    %v364 = vpack.c.b16 %v312, %v310
    %v365 = vpack.c.b16 %v315, %v313
    %v366 = vpack.c.b16 %v316, %v314
    %v367 = vpack.c.b16 %v319, %v317
    %v368 = vpack.c.b16 %v320, %v318
    %v369 = vpack.c.b16 %v323, %v321
    %v370 = vpack.c.b16 %v324, %v322
    %v371 = vpack.c.b16 %v327, %v325
    %v372 = vpack.c.b16 %v328, %v326
    %v373 = vpack.c.b16 %v331, %v329
    %v374 = vpack.c.b16 %v332, %v330
    %v375 = vpack.c.b16 %v335, %v333
    %v376 = vpack.c.b16 %v336, %v334
    %v377 = vpack.c.b16 %v339, %v337
    %v378 = vpack.c.b16 %v340, %v338
    %v379 = vpack.c.b16 %v343, %v341
    %v380 = vpack.c.b16 %v344, %v342
    %v381 = vpack.c.b16 %v347, %v345
    %v382 = vpack.c.b16 %v348, %v346
    %v383 = vpack.c.b16 %v351, %v349
    %v384 = vpack.c.b16 %v352, %v350
    %417 = vmatprep.subr.bf16.mxu0 %v354
    %418 = vmatpush1.bf16.msra.mxu0 %v353
    %419 = vmatprep.subr.bf16.mxu0 %v356
    %420 = vmatpush1.bf16.msra.mxu0 %v355
    %421 = vmatprep.subr.bf16.mxu0 %v358
    %422 = vmatpush1.bf16.msra.mxu0 %v357
    %423 = vmatprep.subr.bf16.mxu0 %v360
    %424 = vmatpush1.bf16.msra.mxu0 %v359
    %425 = vmatprep.subr.bf16.mxu0 %v362
    %426 = vmatpush1.bf16.msra.mxu0 %v361
    %427 = vmatprep.subr.bf16.mxu0 %v364
    %428 = vmatpush1.bf16.msra.mxu0 %v363
    %429 = vmatprep.subr.bf16.mxu0 %v366
    %430 = vmatpush1.bf16.msra.mxu0 %v365
    %431 = vmatprep.subr.bf16.mxu0 %v368
    %432 = vmatpush1.bf16.msra.mxu0 %v367
    %433 = vmatprep.subr.bf16.mxu0 %v370
    %434 = vmatpush1.bf16.msra.mxu0 %v369
    %435 = vmatprep.subr.bf16.mxu0 %v372
    %436 = vmatpush1.bf16.msra.mxu0 %v371
    %437 = vmatprep.subr.bf16.mxu0 %v374
    %438 = vmatpush1.bf16.msra.mxu0 %v373
    %439 = vmatprep.subr.bf16.mxu0 %v376
    %440 = vmatpush1.bf16.msra.mxu0 %v375
    %441 = vmatprep.subr.bf16.mxu0 %v378
    %442 = vmatpush1.bf16.msra.mxu0 %v377
    %443 = vmatprep.subr.bf16.mxu0 %v380
    %444 = vmatpush1.bf16.msra.mxu0 %v379
    %445 = vmatprep.subr.bf16.mxu0 %v382
    %446 = vmatpush1.bf16.msra.mxu0 %v381
    %447 = vmatprep.subr.bf16.mxu0 %v384
    %448 = vmatpush1.bf16.msra.mxu0 %v383
    %449 = vmatprep.mubr.bf16.mxu0 %v245
    %450 = vmatmul.mubr.bf16.gmra.mrb[0].mxu0 %v244
    %v451 = vpop.f32.mrb[0].mxu0
    %v452 = vadd.f32 %v250, %v451
    %v453 = vpop.f32.mrb[0].mxu0
    %v454 = vadd.f32 %v254, %v453
    %v455 = vpop.f32.mrb[0].mxu0
    %v456 = vpop.f32.mrb[0].mxu0
    %457 = vdwg.mxu0
    %v458 = vpack.c.bf16 %v452, %v452
    %v459 = vpack.c.bf16 %v454, %v454
    %v460 = vtanh.bf16.pop %v458
    %v461 = vtanh.bf16.pop %v459
    %v463 = vlaneseq
    %v464 = vshrl.u32 %v463, 7
    %v465 = vsub.s32 0, %v464
    %v466 = vrot.slane %v161, %v465
    %v467 = vlaneseq
    %v468 = vshrl.u32 %v467, 7
    %v469 = vsub.s32 1, %v468
    %v470 = vrot.slane %v161, %v469
    %v505 = vunpack.c.l.b16 %v129
    %v506 = vunpack.c.h.b16 %v129
    %v507 = vunpack.c.l.b16 %v130
    %v508 = vunpack.c.h.b16 %v130
    %v509 = vunpack.c.l.b16 %v131
    %v510 = vunpack.c.h.b16 %v131
    %v511 = vunpack.c.l.b16 %v132
    %v512 = vunpack.c.h.b16 %v132
    %v513 = vunpack.c.l.b16 %v133
    %v514 = vunpack.c.h.b16 %v133
    %v515 = vunpack.c.l.b16 %v134
    %v516 = vunpack.c.h.b16 %v134
    %v517 = vunpack.c.l.b16 %v135
    %v518 = vunpack.c.h.b16 %v135
    %v519 = vunpack.c.l.b16 %v136
    %v520 = vunpack.c.h.b16 %v136
    %v521 = vunpack.c.l.b16 %v137
    %v522 = vunpack.c.h.b16 %v137
    %v523 = vunpack.c.l.b16 %v138
    %v524 = vunpack.c.h.b16 %v138
    %v525 = vunpack.c.l.b16 %v139
    %v526 = vunpack.c.h.b16 %v139
    %v527 = vunpack.c.l.b16 %v140
    %v528 = vunpack.c.h.b16 %v140
    %v529 = vunpack.c.l.b16 %v141
    %v530 = vunpack.c.h.b16 %v141
    %v531 = vunpack.c.l.b16 %v142
    %v532 = vunpack.c.h.b16 %v142
    %v533 = vunpack.c.l.b16 %v143
    %v534 = vunpack.c.h.b16 %v143
    %v535 = vunpack.c.l.b16 %v144
    %v536 = vunpack.c.h.b16 %v144
    %v537 = vunpack.c.l.b16 %v145
    %v538 = vunpack.c.h.b16 %v145
    %v539 = vunpack.c.l.b16 %v146
    %v540 = vunpack.c.h.b16 %v146
    %v541 = vunpack.c.l.b16 %v147
    %v542 = vunpack.c.h.b16 %v147
    %v543 = vunpack.c.l.b16 %v148
    %v544 = vunpack.c.h.b16 %v148
    %v545 = vunpack.c.l.b16 %v149
    %v546 = vunpack.c.h.b16 %v149
    %v547 = vunpack.c.l.b16 %v150
    %v548 = vunpack.c.h.b16 %v150
    %v549 = vunpack.c.l.b16 %v151
    %v550 = vunpack.c.h.b16 %v151
    %v551 = vunpack.c.l.b16 %v152
    %v552 = vunpack.c.h.b16 %v152
    %v553 = vunpack.c.l.b16 %v153
    %v554 = vunpack.c.h.b16 %v153
    %v555 = vunpack.c.l.b16 %v154
    %v556 = vunpack.c.h.b16 %v154
    %v557 = vunpack.c.l.b16 %v155
    %v558 = vunpack.c.h.b16 %v155
    %v559 = vunpack.c.l.b16 %v156
    %v560 = vunpack.c.h.b16 %v156
    %v561 = vunpack.c.l.b16 %v157
    %v562 = vunpack.c.h.b16 %v157
    %v563 = vunpack.c.l.b16 %v158
    %v564 = vunpack.c.h.b16 %v158
    %v565 = vunpack.c.l.b16 %v159
    %v566 = vunpack.c.h.b16 %v159
    %v567 = vunpack.c.l.b16 %v160
    %v568 = vunpack.c.h.b16 %v160
    %v569 = vpack.c.b16 %v507, %v505
    %v570 = vpack.c.b16 %v508, %v506
    %v571 = vpack.c.b16 %v511, %v509
    %v572 = vpack.c.b16 %v512, %v510
    %v573 = vpack.c.b16 %v515, %v513
    %v574 = vpack.c.b16 %v516, %v514
    %v575 = vpack.c.b16 %v519, %v517
    %v576 = vpack.c.b16 %v520, %v518
    %v577 = vpack.c.b16 %v523, %v521
    %v578 = vpack.c.b16 %v524, %v522
    %v579 = vpack.c.b16 %v527, %v525
    %v580 = vpack.c.b16 %v528, %v526
    %v581 = vpack.c.b16 %v531, %v529
    %v582 = vpack.c.b16 %v532, %v530
    %v583 = vpack.c.b16 %v535, %v533
    %v584 = vpack.c.b16 %v536, %v534
    %v585 = vpack.c.b16 %v539, %v537
    %v586 = vpack.c.b16 %v540, %v538
    %v587 = vpack.c.b16 %v543, %v541
    %v588 = vpack.c.b16 %v544, %v542
    %v589 = vpack.c.b16 %v547, %v545
    %v590 = vpack.c.b16 %v548, %v546
    %v591 = vpack.c.b16 %v551, %v549
    %v592 = vpack.c.b16 %v552, %v550
    %v593 = vpack.c.b16 %v555, %v553
    %v594 = vpack.c.b16 %v556, %v554
    %v595 = vpack.c.b16 %v559, %v557
    %v596 = vpack.c.b16 %v560, %v558
    %v597 = vpack.c.b16 %v563, %v561
    %v598 = vpack.c.b16 %v564, %v562
    %v599 = vpack.c.b16 %v567, %v565
    %v600 = vpack.c.b16 %v568, %v566
    %633 = vmatprep.subr.bf16.mxu0 %v570
    %634 = vmatpush1.bf16.msra.mxu0 %v569
    %635 = vmatprep.subr.bf16.mxu0 %v572
    %636 = vmatpush1.bf16.msra.mxu0 %v571
    %637 = vmatprep.subr.bf16.mxu0 %v574
    %638 = vmatpush1.bf16.msra.mxu0 %v573
    %639 = vmatprep.subr.bf16.mxu0 %v576
    %640 = vmatpush1.bf16.msra.mxu0 %v575
    %641 = vmatprep.subr.bf16.mxu0 %v578
    %642 = vmatpush1.bf16.msra.mxu0 %v577
    %643 = vmatprep.subr.bf16.mxu0 %v580
    %644 = vmatpush1.bf16.msra.mxu0 %v579
    %645 = vmatprep.subr.bf16.mxu0 %v582
    %646 = vmatpush1.bf16.msra.mxu0 %v581
    %647 = vmatprep.subr.bf16.mxu0 %v584
    %648 = vmatpush1.bf16.msra.mxu0 %v583
    %649 = vmatprep.subr.bf16.mxu0 %v586
    %650 = vmatpush1.bf16.msra.mxu0 %v585
    %651 = vmatprep.subr.bf16.mxu0 %v588
    %652 = vmatpush1.bf16.msra.mxu0 %v587
    %653 = vmatprep.subr.bf16.mxu0 %v590
    %654 = vmatpush1.bf16.msra.mxu0 %v589
    %655 = vmatprep.subr.bf16.mxu0 %v592
    %656 = vmatpush1.bf16.msra.mxu0 %v591
    %657 = vmatprep.subr.bf16.mxu0 %v594
    %658 = vmatpush1.bf16.msra.mxu0 %v593
    %659 = vmatprep.subr.bf16.mxu0 %v596
    %660 = vmatpush1.bf16.msra.mxu0 %v595
    %661 = vmatprep.subr.bf16.mxu0 %v598
    %662 = vmatpush1.bf16.msra.mxu0 %v597
    %663 = vmatprep.subr.bf16.mxu0 %v600
    %664 = vmatpush1.bf16.msra.mxu0 %v599
    %665 = vmatprep.mubr.bf16.mxu0 %v461
    %666 = vmatmul.mubr.bf16.gmra.mrb[0].mxu0 %v460
    %v667 = vpop.f32.mrb[0].mxu0
    %v668 = vadd.f32 %v466, %v667
    %v669 = vpop.f32.mrb[0].mxu0
    %v670 = vadd.f32 %v470, %v669
    %v671 = vpop.f32.mrb[0].mxu0
    %v672 = vpop.f32.mrb[0].mxu0
    %673 = vdwg.mxu0
    %v674 = vpack.c.bf16 %v668, %v668
    %v675 = vpack.c.bf16 %v670, %v670
    %v676 = vtanh.bf16.pop %v674
    %v677 = vtanh.bf16.pop %v675
    %679 = vset.pattern.permute.xlu0 0
    %680 = vperm.xlu0 %679, %v163
    %v681 = vpop.permute.xlu0 %680
    %v683 = vlaneseq
    %v684 = vshrl.u32 %v683, 7
    %v685 = vsub.s32 0, %v684
    %v686 = vrot.slane %v681, %v685
    %v689 = vunpack.c.l.s4 1966171168
    %v690 = vunpack.c.0.s8 %v689
    %v691 = vlaneseq
    %v692 = vshrl.u32 %v691, 7
    %v693 = vsub.s32 %v690, %v692
    %v694 = vrot.slane %v162, %v693
    %v695 = vcombine.high %v694, %v694
    %v697 = vunpack.c.l.s4 1966171168
    %v698 = vunpack.c.0.s8 %v697
    %v699 = vlaneseq
    %v700 = vshrl.u32 %v699, 7
    %v701 = vsub.s32 %v698, %v700
    %v702 = vrot.slane %v694, %v701
    %v704 = vunpack.c.l.s4 1966171168
    %v705 = vunpack.c.0.s8 %v704
    %v706 = vlaneseq
    %v707 = vshrl.u32 %v706, 7
    %v708 = vsub.s32 %v705, %v707
    %v709 = vrot.slane %v695, %v708
    %712 = vmatprep.subr.bf16.mxu0 %v677
    %713 = vmatpush1.bf16.xpose.msra.mxu0 %v676
    %714 = vmatprep.subr.bf16.mxu0 0
    %715 = vmatpush1.bf16.xpose.msra.mxu0 0
    %716 = vmatprep.subr.bf16.mxu0 0
    %717 = vmatpush1.bf16.xpose.msra.mxu0 0
    %718 = vmatprep.subr.bf16.mxu0 0
    %719 = vmatpush1.bf16.xpose.msra.mxu0 0
    %720 = vmatprep.subr.bf16.mxu0 0
    %721 = vmatpush1.bf16.xpose.msra.mxu0 0
    %722 = vmatprep.subr.bf16.mxu0 0
    %723 = vmatpush1.bf16.xpose.msra.mxu0 0
    %724 = vmatprep.subr.bf16.mxu0 0
    %725 = vmatpush1.bf16.xpose.msra.mxu0 0
    %726 = vmatprep.subr.bf16.mxu0 0
    %727 = vmatpush1.bf16.xpose.msra.mxu0 0
    %728 = vmatprep.subr.bf16.mxu0 0
    %729 = vmatpush1.bf16.xpose.msra.mxu0 0
    %730 = vmatprep.subr.bf16.mxu0 0
    %731 = vmatpush1.bf16.xpose.msra.mxu0 0
    %732 = vmatprep.subr.bf16.mxu0 0
    %733 = vmatpush1.bf16.xpose.msra.mxu0 0
    %734 = vmatprep.subr.bf16.mxu0 0
    %735 = vmatpush1.bf16.xpose.msra.mxu0 0
    %736 = vmatprep.subr.bf16.mxu0 0
    %737 = vmatpush1.bf16.xpose.msra.mxu0 0
    %738 = vmatprep.subr.bf16.mxu0 0
    %739 = vmatpush1.bf16.xpose.msra.mxu0 0
    %740 = vmatprep.subr.bf16.mxu0 0
    %741 = vmatpush1.bf16.xpose.msra.mxu0 0
    %742 = vmatprep.subr.bf16.mxu0 0
    %743 = vmatpush1.bf16.xpose.msra.mxu0 0
    %744 = vmatprep.mubr.bf16.mxu0 %v709
    %745 = vmatmul.mubr.bf16.gmra.mrb[0].mxu0 %v702
    %v746 = vpop.f32.mrb[0].mxu0
    %v747 = vadd.f32 %v686, %v746
    %v748 = vpop.f32.mrb[0].mxu0
    %v749 = vpop.f32.mrb[0].mxu0
    %v750 = vpop.f32.mrb[0].mxu0
    %751 = vdwg.mxu0
    %v752 = vld [vmem:[#allocation3 + $0x8] sm:$0xff]
    %v753 = vpack.c.bf16 %v752, %v752
    %v755 = vsel %vm197, %v753, 0
    %757 = vmatprep.subr.bf16.mxu0 %v190
    %758 = vmatpush1.bf16.msra.mxu0 %v189
    %759 = vmatprep.subr.bf16.mxu0 %v192
    %760 = vmatpush1.bf16.msra.mxu0 %v191
    %761 = vmatprep.subr.bf16.mxu0 0
    %762 = vmatpush1.bf16.msra.mxu0 0
    %763 = vmatprep.subr.bf16.mxu0 0
    %764 = vmatpush1.bf16.msra.mxu0 0
    %765 = vmatprep.subr.bf16.mxu0 0
    %766 = vmatpush1.bf16.msra.mxu0 0
    %767 = vmatprep.subr.bf16.mxu0 0
    %768 = vmatpush1.bf16.msra.mxu0 0
    %769 = vmatprep.subr.bf16.mxu0 0
    %770 = vmatpush1.bf16.msra.mxu0 0
    %771 = vmatprep.subr.bf16.mxu0 0
    %772 = vmatpush1.bf16.msra.mxu0 0
    %773 = vmatprep.subr.bf16.mxu0 0
    %774 = vmatpush1.bf16.msra.mxu0 0
    %775 = vmatprep.subr.bf16.mxu0 0
    %776 = vmatpush1.bf16.msra.mxu0 0
    %777 = vmatprep.subr.bf16.mxu0 0
    %778 = vmatpush1.bf16.msra.mxu0 0
    %779 = vmatprep.subr.bf16.mxu0 0
    %780 = vmatpush1.bf16.msra.mxu0 0
    %781 = vmatprep.subr.bf16.mxu0 0
    %782 = vmatpush1.bf16.msra.mxu0 0
    %783 = vmatprep.subr.bf16.mxu0 0
    %784 = vmatpush1.bf16.msra.mxu0 0
    %785 = vmatprep.subr.bf16.mxu0 0
    %786 = vmatpush1.bf16.msra.mxu0 0
    %787 = vmatprep.subr.bf16.mxu0 0
    %788 = vmatpush1.bf16.msra.mxu0 0
    %789 = vmatprep.mubr.bf16.mxu0 0
    %790 = vmatmul.mubr.bf16.gmra.mrb[0].mxu0 %v755
    %v791 = vpop.f32.mrb[0].mxu0
    %v792 = vadd.f32 %v170, %v791
    %v793 = vpop.f32.mrb[0].mxu0
    %v794 = vadd.f32 %v174, %v793
    %v795 = vpop.f32.mrb[0].mxu0
    %v796 = vpop.f32.mrb[0].mxu0
    %797 = vdwg.mxu0
    %v798 = vpack.c.bf16 %v792, %v792
    %v799 = vpack.c.bf16 %v794, %v794
    %v800 = vtanh.bf16.pop %v798
    %v801 = vtanh.bf16.pop %v799
    %802 = vmatprep.subr.bf16.mxu0 %v354
    %803 = vmatpush1.bf16.msra.mxu0 %v353
    %804 = vmatprep.subr.bf16.mxu0 %v356
    %805 = vmatpush1.bf16.msra.mxu0 %v355
    %806 = vmatprep.subr.bf16.mxu0 %v358
    %807 = vmatpush1.bf16.msra.mxu0 %v357
    %808 = vmatprep.subr.bf16.mxu0 %v360
    %809 = vmatpush1.bf16.msra.mxu0 %v359
    %810 = vmatprep.subr.bf16.mxu0 %v362
    %811 = vmatpush1.bf16.msra.mxu0 %v361
    %812 = vmatprep.subr.bf16.mxu0 %v364
    %813 = vmatpush1.bf16.msra.mxu0 %v363
    %814 = vmatprep.subr.bf16.mxu0 %v366
    %815 = vmatpush1.bf16.msra.mxu0 %v365
    %816 = vmatprep.subr.bf16.mxu0 %v368
    %817 = vmatpush1.bf16.msra.mxu0 %v367
    %818 = vmatprep.subr.bf16.mxu0 %v370
    %819 = vmatpush1.bf16.msra.mxu0 %v369
    %820 = vmatprep.subr.bf16.mxu0 %v372
    %821 = vmatpush1.bf16.msra.mxu0 %v371
    %822 = vmatprep.subr.bf16.mxu0 %v374
    %823 = vmatpush1.bf16.msra.mxu0 %v373
    %824 = vmatprep.subr.bf16.mxu0 %v376
    %825 = vmatpush1.bf16.msra.mxu0 %v375
    %826 = vmatprep.subr.bf16.mxu0 %v378
    %827 = vmatpush1.bf16.msra.mxu0 %v377
    %828 = vmatprep.subr.bf16.mxu0 %v380
    %829 = vmatpush1.bf16.msra.mxu0 %v379
    %830 = vmatprep.subr.bf16.mxu0 %v382
    %831 = vmatpush1.bf16.msra.mxu0 %v381
    %832 = vmatprep.subr.bf16.mxu0 %v384
    %833 = vmatpush1.bf16.msra.mxu0 %v383
    %834 = vmatprep.mubr.bf16.mxu0 %v801
    %835 = vmatmul.mubr.bf16.gmra.mrb[0].mxu0 %v800
    %v836 = vpop.f32.mrb[0].mxu0
    %v837 = vadd.f32 %v250, %v836
    %v838 = vpop.f32.mrb[0].mxu0
    %v839 = vadd.f32 %v254, %v838
    %v840 = vpop.f32.mrb[0].mxu0
    %v841 = vpop.f32.mrb[0].mxu0
    %842 = vdwg.mxu0
    %v843 = vpack.c.bf16 %v837, %v837
    %v844 = vpack.c.bf16 %v839, %v839
    %v845 = vtanh.bf16.pop %v843
    %v846 = vtanh.bf16.pop %v844
    %847 = vmatprep.subr.bf16.mxu0 %v570
    %848 = vmatpush1.bf16.msra.mxu0 %v569
    %849 = vmatprep.subr.bf16.mxu0 %v572
    %850 = vmatpush1.bf16.msra.mxu0 %v571
    %851 = vmatprep.subr.bf16.mxu0 %v574
    %852 = vmatpush1.bf16.msra.mxu0 %v573
    %853 = vmatprep.subr.bf16.mxu0 %v576
    %854 = vmatpush1.bf16.msra.mxu0 %v575
    %855 = vmatprep.subr.bf16.mxu0 %v578
    %856 = vmatpush1.bf16.msra.mxu0 %v577
    %857 = vmatprep.subr.bf16.mxu0 %v580
    %858 = vmatpush1.bf16.msra.mxu0 %v579
    %859 = vmatprep.subr.bf16.mxu0 %v582
    %860 = vmatpush1.bf16.msra.mxu0 %v581
    %861 = vmatprep.subr.bf16.mxu0 %v584
    %862 = vmatpush1.bf16.msra.mxu0 %v583
    %863 = vmatprep.subr.bf16.mxu0 %v586
    %864 = vmatpush1.bf16.msra.mxu0 %v585
    %865 = vmatprep.subr.bf16.mxu0 %v588
    %866 = vmatpush1.bf16.msra.mxu0 %v587
    %867 = vmatprep.subr.bf16.mxu0 %v590
    %868 = vmatpush1.bf16.msra.mxu0 %v589
    %869 = vmatprep.subr.bf16.mxu0 %v592
    %870 = vmatpush1.bf16.msra.mxu0 %v591
    %871 = vmatprep.subr.bf16.mxu0 %v594
    %872 = vmatpush1.bf16.msra.mxu0 %v593
    %873 = vmatprep.subr.bf16.mxu0 %v596
    %874 = vmatpush1.bf16.msra.mxu0 %v595
    %875 = vmatprep.subr.bf16.mxu0 %v598
    %876 = vmatpush1.bf16.msra.mxu0 %v597
    %877 = vmatprep.subr.bf16.mxu0 %v600
    %878 = vmatpush1.bf16.msra.mxu0 %v599
    %879 = vmatprep.mubr.bf16.mxu0 %v846
    %880 = vmatmul.mubr.bf16.gmra.mrb[0].mxu0 %v845
    %v881 = vpop.f32.mrb[0].mxu0
    %v882 = vadd.f32 %v466, %v881
    %v883 = vpop.f32.mrb[0].mxu0
    %v884 = vadd.f32 %v470, %v883
    %v885 = vpop.f32.mrb[0].mxu0
    %v886 = vpop.f32.mrb[0].mxu0
    %887 = vdwg.mxu0
    %v888 = vpack.c.bf16 %v882, %v882
    %v889 = vpack.c.bf16 %v884, %v884
    %v890 = vtanh.bf16.pop %v888
    %v891 = vtanh.bf16.pop %v889
    %892 = vmatprep.subr.bf16.mxu0 %v891
    %893 = vmatpush1.bf16.xpose.msra.mxu0 %v890
    %894 = vmatprep.subr.bf16.mxu0 0
    %895 = vmatpush1.bf16.xpose.msra.mxu0 0
    %896 = vmatprep.subr.bf16.mxu0 0
    %897 = vmatpush1.bf16.xpose.msra.mxu0 0
    %898 = vmatprep.subr.bf16.mxu0 0
    %899 = vmatpush1.bf16.xpose.msra.mxu0 0
    %900 = vmatprep.subr.bf16.mxu0 0
    %901 = vmatpush1.bf16.xpose.msra.mxu0 0
    %902 = vmatprep.subr.bf16.mxu0 0
    %903 = vmatpush1.bf16.xpose.msra.mxu0 0
    %904 = vmatprep.subr.bf16.mxu0 0
    %905 = vmatpush1.bf16.xpose.msra.mxu0 0
    %906 = vmatprep.subr.bf16.mxu0 0
    %907 = vmatpush1.bf16.xpose.msra.mxu0 0
    %908 = vmatprep.subr.bf16.mxu0 0
    %909 = vmatpush1.bf16.xpose.msra.mxu0 0
    %910 = vmatprep.subr.bf16.mxu0 0
    %911 = vmatpush1.bf16.xpose.msra.mxu0 0
    %912 = vmatprep.subr.bf16.mxu0 0
    %913 = vmatpush1.bf16.xpose.msra.mxu0 0
    %914 = vmatprep.subr.bf16.mxu0 0
    %915 = vmatpush1.bf16.xpose.msra.mxu0 0
    %916 = vmatprep.subr.bf16.mxu0 0
    %917 = vmatpush1.bf16.xpose.msra.mxu0 0
    %918 = vmatprep.subr.bf16.mxu0 0
    %919 = vmatpush1.bf16.xpose.msra.mxu0 0
    %920 = vmatprep.subr.bf16.mxu0 0
    %921 = vmatpush1.bf16.xpose.msra.mxu0 0
    %922 = vmatprep.subr.bf16.mxu0 0
    %923 = vmatpush1.bf16.xpose.msra.mxu0 0
    %924 = vmatprep.mubr.bf16.mxu0 %v709
    %925 = vmatmul.mubr.bf16.gmra.mrb[0].mxu0 %v702
    %v926 = vpop.f32.mrb[0].mxu0
    %v927 = vadd.f32 %v686, %v926
    %v928 = vpop.f32.mrb[0].mxu0
    %v929 = vpop.f32.mrb[0].mxu0
    %v930 = vpop.f32.mrb[0].mxu0
    %931 = vdwg.mxu0
    %933 = vrot.lane.b32.xlu0 %v927, 8
    %v934 = vpop.permute.xlu0 %933
    %vm936 = vcmask 64512
    %v937 = vsel %vm936, %v747, %v934
    %vm938 = vcmask 122880
    %939 = vst.msk [vmem:[#allocation11] sm:$0x1] %vm938, %v937
    // Predicated region
    $region54: #{tpu_custom_call.1} parent=1 // pred_check
      _
    $region55: #{tpu_custom_call.1} parent=1 // pred_check_branch
      %941 = sbr.rel (0) target = $region57
    $region56: #{tpu_custom_call.1} parent=1 // pred_region
      %s943 = ssub.s32 16, 16
      %944 = vsyncadd [#allocation5], %s943
      %s946 = sshll.u32 [#allocation11], 4
      %s947 = int_to_ptr.vmem [resolvable:$true] %s946
      %949 = dma.vmem_to_hbm [thread:$0]  %s947, 16, %s9, [#allocation5]
    $region57: #{tpu_custom_call.1} parent=1 // pred_fallthru
      _
    // Predicated region
    $region58: #{tpu_custom_call.1} parent=1 // pred_check
      _
    $region59: #{tpu_custom_call.1} parent=1 // pred_check_branch
      %951 = sbr.rel (0) target = $region61
    $region60: #{tpu_custom_call.1} parent=1 // pred_region
      %952 = dma.done [#allocation5], 16
    $region61: #{tpu_custom_call.1} parent=1 // pred_fallthru
      _
    %953 = vsyncpa [#allocation4], 1
    %954 = vsyncpa [#allocation7], 1
    %955 = vsyncpa [#allocation10], 1
    %956 = vsyncpa [#allocation5], 1

</llo_original>
